<compile_context>
chip_gen: v7x
topology: tpu7x:2x2x1
jax: 0.10.0
libtpu: 0.0.40
codegen_flags: <defaults>
</compile_context>

<pallas_src>
import functools

import jax
import jax.numpy as jnp
from jax.experimental import pallas as pl
from jax.experimental.pallas import tpu as pltpu

HIDDEN_DIM = 32
LANES = 128
GROUPS = LANES // HIDDEN_DIM          # 4 original tokens packed per 128-lane row
TCOLS = 8                             # t cols: [t_g0..t_g3, 1 (bias), 0, 0, 0]
ALPHA = 2.0 / 5.0
BETA = 4.0 / 5.0
LN_EPS = 1e-5


def _round_up(v, m):
    return ((v + m - 1) // m) * m


def _device_kind():
    try:
        return jax.devices()[0].device_kind.lower()
    except Exception:
        return ""


def gru_flow_kernel(x_ref, t_ref, wrz_ref, wh_ref, avg_ref, tw_ref, p_ref,
                    o_ref, *, act_dtype):
    """One (TR, 128) packed tile of the GRU-flow forward.

    x_ref  : (TR, 128) f32   -- 4 original 32-dim tokens per packed row
    t_ref  : (TR, 8)   f32   -- cols 0..3 = per-token t, col 4 = 1.0 (bias), rest 0
    wrz_ref: (128, 256) bf16 -- [blkdiag(W_hr[:, :D].T) | blkdiag(W_hz[:, :D].T)]
    wh_ref : (128, 128) bf16 -- blkdiag(W_hh[:, :D].T)
    avg_ref: (256, 256) f32  -- block-diagonal (1/D)-averaging matrix (LayerNorm)
    tw_ref : (8, 512)  f32   -- t-column + folded-bias projections [r | z | h | time]
    p_ref  : (8, 256)  f32   -- LN gamma/beta rows
    o_ref  : (TR, 128) f32
    """
    f32 = jnp.float32
    bf16 = jnp.bfloat16
    L = LANES

    x = x_ref[...]                       # (TR, 128) f32
    xb = x.astype(bf16)                  # bf16 view for the MXU
    xa = x.astype(act_dtype)             # elementwise-precision copy

    A256 = avg_ref[...]                  # (256, 256)
    A128 = A256[:L, :L]

    # t-column + folded-bias contributions for all four linear paths: one tiny matmul.
    tproj = jnp.dot(t_ref[...], tw_ref[...], preferred_element_type=f32)  # (TR, 512)

    g_rz, b_rz = p_ref[0:1, :], p_ref[1:2, :]
    g_u, b_u = p_ref[2:3, :L], p_ref[3:4, :L]

    def layer_norm(v, A, g, b):
        # Independent mean / second-moment block-diagonal matmuls (no serial
        # MXU->VPU->MXU chain).  Kept in f32 for a stable variance.
        mu = jnp.dot(v, A, preferred_element_type=f32)
        m2 = jnp.dot(v * v, A, preferred_element_type=f32)
        var = jnp.maximum(m2 - mu * mu, 0.0)
        return (v - mu) * jax.lax.rsqrt(var + LN_EPS) * g + b

    # pre_r | pre_z with one fused (TR,128)@(128,256) bf16 MXU matmul.
    pre_rz = jnp.dot(xb, wrz_ref[...], preferred_element_type=f32) + tproj[:, :2 * L]
    sig_rz = jax.nn.sigmoid(layer_norm(pre_rz, A256, g_rz, b_rz).astype(act_dtype))
    r = BETA * sig_rz[:, :L]
    z = ALPHA * sig_rz[:, L:]

    # u = tanh(ln3(lin_hh([r*x, t])))
    rx = (r * xa).astype(bf16)
    pre_u = jnp.dot(rx, wh_ref[...], preferred_element_type=f32) + tproj[:, 2 * L:3 * L]
    u = jnp.tanh(layer_norm(pre_u, A128, g_u, b_u).astype(act_dtype))

    # time_net (TimeTanh): tanh(W_time * t + b_time); bias already folded into tproj.
    tnet = jnp.tanh(tproj[:, 3 * L:4 * L].astype(act_dtype))

    res = z * (u - xa)
    o_ref[...] = x + (tnet * res).astype(f32)


def gru_flow_block_forward(x, h, t, params, *, tile_rows=None, act_dtype=None):
    """Forward of GRUFlowBlock_LN.  (`h` is accepted but unused, matching the
    PyTorch forward, which ignores its second argument.)"""
    del h  # unused by the reference forward
    B, S, D = x.shape
    assert D == HIDDEN_DIM and LANES % D == 0
    G = GROUPS
    N = B * S

    kind = _device_kind()
    is_v5 = "v5" in kind
    is_v7 = "v7" in kind
    if act_dtype is None:
        # v5-class chips have no bf16 VPU/EUP path; keep elementwise in f32.
        act_dtype = jnp.float32 if is_v5 else jnp.bfloat16
    if tile_rows is None:
        tile_rows = 2048            # 2048 packed rows = 8192 tokens per grid step

    rows = -(-N // G)                       # packed 128-lane rows needed
    rows_p = _round_up(rows, 8)             # minimal f32 sublane padding only
    tr_cap = tile_rows
    if is_v7:
        # Keep >= 2 grid steps so dimension_semantics=("parallel",) can shard
        # the grid across the two TensorCores of a v7x chip.
        tr_cap = min(tr_cap, max(8, _round_up(-(-rows // 2), 8)))
    tr = _round_up(max(1, min(tr_cap, rows)), 8)
    pad = rows_p * G - N

    x2 = x.reshape(N, D).astype(jnp.float32)
    t2 = t.reshape(N, 1).astype(jnp.float32)
    if pad:
        x2 = jnp.pad(x2, ((0, pad), (0, 0)))
        t2 = jnp.pad(t2, ((0, pad), (0, 0)))
    xp = x2.reshape(rows_p, G * D)          # free row-major view (no dtype change)
    t4 = t2.reshape(rows_p, G)
    tp = jnp.concatenate(
        [t4,
         jnp.ones((rows_p, 1), jnp.float32),                 # bias column
         jnp.zeros((rows_p, TCOLS - G - 1), jnp.float32)], axis=1)

    wrz_bd, wh_bd, avg, tw, packed = params

    # Generation-aware scoped-VMEM budget (v7x: 64 MiB physical per core).
    if ("v6" in kind) or ("v5" in kind) or ("v4" in kind):
        vmem_limit = 100 << 20
    else:
        vmem_limit = 48 << 20

    grid = (pl.cdiv(rows_p, tr),)
    kern = functools.partial(gru_flow_kernel, act_dtype=act_dtype)
    out = pl.pallas_call(
        kern,
        out_shape=jax.ShapeDtypeStruct((rows_p, G * D), jnp.float32),
        grid_spec=pltpu.PrefetchScalarGridSpec(
            num_scalar_prefetch=0,
            grid=grid,
            in_specs=[
                pl.BlockSpec((tr, G * D), lambda i: (i, 0)),            # packed x
                pl.BlockSpec((tr, TCOLS), lambda i: (i, 0)),            # packed t
                pl.BlockSpec((G * D, 2 * G * D), lambda i: (0, 0)),     # W_hr|W_hz blkdiag
                pl.BlockSpec((G * D, G * D), lambda i: (0, 0)),         # W_hh blkdiag
                pl.BlockSpec((2 * G * D, 2 * G * D), lambda i: (0, 0)), # LN averaging
                pl.BlockSpec((TCOLS, 4 * G * D), lambda i: (0, 0)),     # t proj + biases
                pl.BlockSpec((8, 2 * G * D), lambda i: (0, 0)),         # LN gamma/beta
            ],
            out_specs=pl.BlockSpec((tr, G * D), lambda i: (i, 0)),
        ),
        compiler_params=pltpu.CompilerParams(
            dimension_semantics=("parallel",),
            vmem_limit_bytes=vmem_limit),
    )(xp, tp, wrz_bd, wh_bd, avg, tw, packed)

    y = out.reshape(rows_p * G, D)
    if pad:
        y = y[:N]
    return y.reshape(B, S, D)


# ---------------------------------------------------------------------------
# Parameter construction (plain JAX "glue"): deterministic synthetic init.
# ---------------------------------------------------------------------------
def _spectral_normalize(W, n_iter=5):
    """Divide W (out, in) by its largest singular value estimated with n_iter
    deterministic power iterations (mimics torch spectral_norm)."""
    # TODO(synk): torch keeps a persistent `u` buffer across forwards; here we
    # run fresh deterministic iterations as a parameter-preprocessing step.
    u = jnp.ones((W.shape[0],), W.dtype) / jnp.sqrt(jnp.float32(W.shape[0]))
    v = None
    for _ in range(n_iter):
        v = W.T @ u
        v = v / (jnp.linalg.norm(v) + 1e-12)
        u = W @ v
        u = u / (jnp.linalg.norm(u) + 1e-12)
    sigma = u @ (W @ v)
    return W / sigma


def make_params(key, hidden_dim=HIDDEN_DIM):
    D = hidden_dim
    G = LANES // D
    keys = jax.random.split(key, 4)

    def linear_init(k, out_dim, in_dim):
        bound = 1.0 / jnp.sqrt(jnp.float32(in_dim))
        kw, kb = jax.random.split(k)
        W = jax.random.uniform(kw, (out_dim, in_dim), jnp.float32, -bound, bound)
        b = jax.random.uniform(kb, (out_dim,), jnp.float32, -bound, bound)
        return W, b

    # lin_hr, lin_hz, lin_hh: Linear(D + 1 -> D), spectral-normalized.
    W_hr, b_hr = linear_init(keys[0], D, D + 1)
    W_hz, b_hz = linear_init(keys[1], D, D + 1)
    W_hh, b_hh = linear_init(keys[2], D, D + 1)
    W_hr = _spectral_normalize(W_hr)
    W_hz = _spectral_normalize(W_hz)
    W_hh = _spectral_normalize(W_hh)

    # time_net (TimeTanh): Linear(1 -> D)
    W_time, b_time = linear_init(keys[3], D, 1)

    # LayerNorm params (torch default: gamma=1, beta=0)
    g1 = jnp.ones((D,), jnp.float32); be1 = jnp.zeros((D,), jnp.float32)
    g2 = jnp.ones((D,), jnp.float32); be2 = jnp.zeros((D,), jnp.float32)
    g3 = jnp.ones((D,), jnp.float32); be3 = jnp.zeros((D,), jnp.float32)

    blkdiag = lambda blk, n=G: jax.scipy.linalg.block_diag(*([blk] * n))

    # Fused (W_hr | W_hz) block-diagonal h-part weight, stored bf16 for the MXU.
    wrz_bd = jnp.concatenate(
        [blkdiag(W_hr[:, :D].T), blkdiag(W_hz[:, :D].T)], axis=1
    ).astype(jnp.bfloat16)                                   # (128, 256)
    wh_bd = blkdiag(W_hh[:, :D].T).astype(jnp.bfloat16)      # (128, 128)

    # Block-diagonal per-32-lane-group averaging matrix (LayerNorm stats, f32).
    avg = blkdiag(jnp.full((D, D), 1.0 / D, jnp.float32), 2 * G)   # (256, 256)

    # t-column projections + folded biases: row g (g<4) carries the t
    # coefficient of group g; row 4 (hit by the constant-1 column of tp)
    # carries the biases of all four linear paths.
    tblk = lambda col: blkdiag(col.reshape(1, D))            # (G, G*D)
    tw_t = jnp.concatenate([tblk(W_hr[:, D]), tblk(W_hz[:, D]),
                            tblk(W_hh[:, D]), tblk(W_time[:, 0])], axis=1)
    tw_b = jnp.concatenate([jnp.tile(b_hr, G), jnp.tile(b_hz, G),
                            jnp.tile(b_hh, G), jnp.tile(b_time, G)])[None, :]
    tw = jnp.concatenate(
        [tw_t, tw_b, jnp.zeros((TCOLS - G - 1, 4 * G * D), jnp.float32)], axis=0)

    # LayerNorm gamma/beta packed per lane (rows 0/1: rz slab, rows 2/3: u slab).
    zero = jnp.zeros((G * D,), jnp.float32)
    packed = jnp.stack(
        [jnp.concatenate([jnp.tile(g1, G), jnp.tile(g2, G)]),
         jnp.concatenate([jnp.tile(be1, G), jnp.tile(be2, G)]),
         jnp.concatenate([jnp.tile(g3, G), zero]),
         jnp.concatenate([jnp.tile(be3, G), zero])]
        + [jnp.zeros((2 * G * D,), jnp.float32)] * 4)        # (8, 256)

    kernel_params = (wrz_bd, wh_bd, avg, tw, packed)
    raw = (W_hr, b_hr, W_hz, b_hz, W_hh, b_hh, W_time, b_time,
           g1, be1, g2, be2, g3, be3)
    return kernel_params, raw


def reference_forward(x, t, raw):
    """Pure-JAX reference matching the PyTorch semantics (for sanity check)."""
    (W_hr, b_hr, W_hz, b_hz, W_hh, b_hh, W_time, b_time,
     g1, be1, g2, be2, g3, be3) = raw

    def ln(v, g, b):
        mu = jnp.mean(v, axis=-1, keepdims=True)
        var = jnp.mean((v - mu) ** 2, axis=-1, keepdims=True)
        return (v - mu) / jnp.sqrt(var + LN_EPS) * g + b

    inp = jnp.concatenate([x, t], axis=-1)
    r = BETA * jax.nn.sigmoid(ln(inp @ W_hr.T + b_hr, g1, be1))
    z = ALPHA * jax.nn.sigmoid(ln(inp @ W_hz.T + b_hz, g2, be2))
    inp2 = jnp.concatenate([r * x, t], axis=-1)
    u = jnp.tanh(ln(inp2 @ W_hh.T + b_hh, g3, be3))
    res = z * (u - x)
    tnet = jnp.tanh(t @ W_time.T + b_time)
    return x + tnet * res


if __name__ == "__main__":
    key = jax.random.PRNGKey(0)
    k_x, k_h, k_t, k_p = jax.random.split(key, 4)

    B, S, D = 2, 8, HIDDEN_DIM
    x = jax.random.normal(k_x, (B, S, D), jnp.float32)
    h = jax.random.normal(k_h, (B, S, D), jnp.float32)  # unused by forward
    t = jax.random.uniform(k_t, (B, S, 1), jnp.float32)

    params, raw = make_params(k_p, D)

    out = gru_flow_block_forward(x, h, t, params)
    out = jax.block_until_ready(out)

    assert out.shape == (B, S, D)
    assert bool(jnp.all(jnp.isfinite(out)))

    # Structural check: reference evaluated with the same bf16-stored GRU
    # weights the kernel uses (isolates kernel math from weight quantization).
    q = lambda w: w.astype(jnp.bfloat16).astype(jnp.float32)
    raw_q = list(raw)
    for i in (0, 2, 4):            # W_hr, W_hz, W_hh
        raw_q[i] = q(raw_q[i])
    ref_q = reference_forward(x, t, tuple(raw_q))
    err_q = float(jnp.max(jnp.abs(out - ref_q)))
    assert err_q < 5e-2, ("kernel vs bf16-weight reference", err_q)

    # End-to-end check against the full-f32 reference (bounds quantization impact).
    ref_f = reference_forward(x, t, raw)
    err_f = float(jnp.max(jnp.abs(out - ref_f)))
    assert err_f < 1.5e-1, ("kernel vs f32 reference", err_f)

    print("KERNEL_OK")
</pallas_src>

<mosaic_0001>
module attributes {stable_mosaic.version = 11 : i64} {
  func.func @gru_flow_kernel(%arg0: i32, %arg1: memref<8x128xf32, #tpu.memory_space<vmem>>, %arg2: memref<8x8xf32, #tpu.memory_space<vmem>>, %arg3: memref<128x256xbf16, #tpu.memory_space<vmem>>, %arg4: memref<128x128xbf16, #tpu.memory_space<vmem>>, %arg5: memref<256x256xf32, #tpu.memory_space<vmem>>, %arg6: memref<8x512xf32, #tpu.memory_space<vmem>>, %arg7: memref<8x256xf32, #tpu.memory_space<vmem>>, %arg8: memref<8x128xf32, #tpu.memory_space<vmem>>) attributes {dimension_semantics = [#tpu.dimension_semantics<parallel>], iteration_bounds = array<i64: 1>, scalar_prefetch = 0 : i64, scratch_operands = 0 : i64, tpu.core_type = #tpu.core_type<tc>, window_params = [{transform_indices = @transform_0, window_bounds = array<i64: 8, 128>}, {transform_indices = @transform_1, window_bounds = array<i64: 8, 8>}, {pipeline_mode = #tpu.pipeline_mode<synchronous>, transform_indices = @transform_2, window_bounds = array<i64: 128, 256>}, {pipeline_mode = #tpu.pipeline_mode<synchronous>, transform_indices = @transform_3, window_bounds = array<i64: 128, 128>}, {pipeline_mode = #tpu.pipeline_mode<synchronous>, transform_indices = @transform_4, window_bounds = array<i64: 256, 256>}, {pipeline_mode = #tpu.pipeline_mode<synchronous>, transform_indices = @transform_5, window_bounds = array<i64: 8, 512>}, {pipeline_mode = #tpu.pipeline_mode<synchronous>, transform_indices = @transform_6, window_bounds = array<i64: 8, 256>}, {transform_indices = @transform_7, window_bounds = array<i64: 8, 128>}]} {
    %c0 = arith.constant 0 : index
    %c0_0 = arith.constant 0 : index
    %0 = vector.load %arg1[%c0, %c0_0] : memref<8x128xf32, #tpu.memory_space<vmem>>, vector<8x128xf32>
    %1 = arith.truncf %0 : vector<8x128xf32> to vector<8x128xbf16>
    %2 = arith.truncf %0 : vector<8x128xf32> to vector<8x128xbf16>
    %c0_1 = arith.constant 0 : index
    %c0_2 = arith.constant 0 : index
    %3 = vector.load %arg5[%c0_1, %c0_2] : memref<256x256xf32, #tpu.memory_space<vmem>>, vector<256x256xf32>
    %4 = vector.extract_strided_slice %3 {offsets = [0, 0], sizes = [128, 128], strides = [1, 1]} : vector<256x256xf32> to vector<128x128xf32>
    %c0_3 = arith.constant 0 : index
    %c0_4 = arith.constant 0 : index
    %5 = vector.load %arg2[%c0_3, %c0_4] : memref<8x8xf32, #tpu.memory_space<vmem>>, vector<8x8xf32>
    %c0_5 = arith.constant 0 : index
    %c0_6 = arith.constant 0 : index
    %6 = vector.load %arg6[%c0_5, %c0_6] : memref<8x512xf32, #tpu.memory_space<vmem>>, vector<8x512xf32>
    %cst = arith.constant dense<0.000000e+00> : vector<8x512xf32>
    %7 = tpu.matmul %5, %6, %cst {dimension_numbers = #tpu.dot_dimension_numbers<[1], [0], [0], [1], [0, 0, 1, 1], [], []>} : vector<8x8xf32>, vector<8x512xf32>, vector<8x512xf32> -> vector<8x512xf32>
    %c0_7 = arith.constant 0 : index
    %c0_8 = arith.constant 0 : index
    %8 = vector.load %arg7[%c0_7, %c0_8] : memref<8x256xf32, #tpu.memory_space<vmem>>, vector<1x256xf32>
    %c1 = arith.constant 1 : index
    %c0_9 = arith.constant 0 : index
    %9 = vector.load %arg7[%c1, %c0_9] : memref<8x256xf32, #tpu.memory_space<vmem>>, vector<1x256xf32>
    %c2 = arith.constant 2 : index
    %c0_10 = arith.constant 0 : index
    %10 = vector.load %arg7[%c2, %c0_10] : memref<8x256xf32, #tpu.memory_space<vmem>>, vector<1x128xf32>
    %c3 = arith.constant 3 : index
    %c0_11 = arith.constant 0 : index
    %11 = vector.load %arg7[%c3, %c0_11] : memref<8x256xf32, #tpu.memory_space<vmem>>, vector<1x128xf32>
    %c0_12 = arith.constant 0 : index
    %c0_13 = arith.constant 0 : index
    %12 = vector.load %arg3[%c0_12, %c0_13] : memref<128x256xbf16, #tpu.memory_space<vmem>>, vector<128x256xbf16>
    %cst_14 = arith.constant dense<0.000000e+00> : vector<8x256xf32>
    %13 = tpu.matmul %1, %12, %cst_14 {dimension_numbers = #tpu.dot_dimension_numbers<[1], [0], [0], [1], [0, 0, 1, 1], [], []>} : vector<8x128xbf16>, vector<128x256xbf16>, vector<8x256xf32> -> vector<8x256xf32>
    %14 = vector.extract_strided_slice %7 {offsets = [0, 0], sizes = [8, 256], strides = [1, 1]} : vector<8x512xf32> to vector<8x256xf32>
    %15 = arith.addf %13, %14 : vector<8x256xf32>
    %cst_15 = arith.constant dense<0.000000e+00> : vector<8x256xf32>
    %16 = tpu.matmul %15, %3, %cst_15 {dimension_numbers = #tpu.dot_dimension_numbers<[1], [0], [0], [1], [0, 0, 1, 1], [], []>} : vector<8x256xf32>, vector<256x256xf32>, vector<8x256xf32> -> vector<8x256xf32>
    %17 = arith.mulf %15, %15 : vector<8x256xf32>
    %cst_16 = arith.constant dense<0.000000e+00> : vector<8x256xf32>
    %18 = tpu.matmul %17, %3, %cst_16 {dimension_numbers = #tpu.dot_dimension_numbers<[1], [0], [0], [1], [0, 0, 1, 1], [], []>} : vector<8x256xf32>, vector<256x256xf32>, vector<8x256xf32> -> vector<8x256xf32>
    %19 = arith.mulf %16, %16 : vector<8x256xf32>
    %20 = arith.subf %18, %19 : vector<8x256xf32>
    %cst_17 = arith.constant 0.000000e+00 : f32
    %21 = vector.broadcast %cst_17 : f32 to vector<8x256xf32>
    %22 = arith.maximumf %20, %21 : vector<8x256xf32>
    %23 = arith.subf %15, %16 : vector<8x256xf32>
    %cst_18 = arith.constant 9.99999974E-6 : f32
    %24 = vector.broadcast %cst_18 : f32 to vector<8x256xf32>
    %25 = arith.addf %22, %24 : vector<8x256xf32>
    %26 = math.rsqrt %25 : vector<8x256xf32>
    %27 = arith.mulf %23, %26 : vector<8x256xf32>
    %28 = vector.broadcast %8 : vector<1x256xf32> to vector<8x256xf32>
    %29 = arith.mulf %27, %28 : vector<8x256xf32>
    %30 = vector.broadcast %9 : vector<1x256xf32> to vector<8x256xf32>
    %31 = arith.addf %29, %30 : vector<8x256xf32>
    %32 = arith.truncf %31 : vector<8x256xf32> to vector<8x256xbf16>
    %33 = arith.negf %32 : vector<8x256xbf16>
    %34 = math.exp %33 : vector<8x256xbf16>
    %cst_19 = arith.constant 1.000000e+00 : bf16
    %35 = vector.broadcast %cst_19 : bf16 to vector<8x256xbf16>
    %36 = arith.addf %35, %34 : vector<8x256xbf16>
    %37 = arith.divf %35, %36 : vector<8x256xbf16>
    %38 = vector.extract_strided_slice %37 {offsets = [0, 0], sizes = [8, 128], strides = [1, 1]} : vector<8x256xbf16> to vector<8x128xbf16>
    %cst_20 = arith.constant 8.007810e-01 : bf16
    %39 = vector.broadcast %cst_20 : bf16 to vector<8x128xbf16>
    %40 = arith.mulf %39, %38 : vector<8x128xbf16>
    %41 = vector.extract_strided_slice %37 {offsets = [0, 128], sizes = [8, 128], strides = [1, 1]} : vector<8x256xbf16> to vector<8x128xbf16>
    %cst_21 = arith.constant 4.003910e-01 : bf16
    %42 = vector.broadcast %cst_21 : bf16 to vector<8x128xbf16>
    %43 = arith.mulf %42, %41 : vector<8x128xbf16>
    %44 = arith.mulf %40, %2 : vector<8x128xbf16>
    %c0_22 = arith.constant 0 : index
    %c0_23 = arith.constant 0 : index
    %45 = vector.load %arg4[%c0_22, %c0_23] : memref<128x128xbf16, #tpu.memory_space<vmem>>, vector<128x128xbf16>
    %cst_24 = arith.constant dense<0.000000e+00> : vector<8x128xf32>
    %46 = tpu.matmul %44, %45, %cst_24 {dimension_numbers = #tpu.dot_dimension_numbers<[1], [0], [0], [1], [0, 0, 1, 1], [], []>} : vector<8x128xbf16>, vector<128x128xbf16>, vector<8x128xf32> -> vector<8x128xf32>
    %47 = vector.extract_strided_slice %7 {offsets = [0, 256], sizes = [8, 128], strides = [1, 1]} : vector<8x512xf32> to vector<8x128xf32>
    %48 = arith.addf %46, %47 : vector<8x128xf32>
    %cst_25 = arith.constant dense<0.000000e+00> : vector<8x128xf32>
    %49 = tpu.matmul %48, %4, %cst_25 {dimension_numbers = #tpu.dot_dimension_numbers<[1], [0], [0], [1], [0, 0, 1, 1], [], []>} : vector<8x128xf32>, vector<128x128xf32>, vector<8x128xf32> -> vector<8x128xf32>
    %50 = arith.mulf %48, %48 : vector<8x128xf32>
    %cst_26 = arith.constant dense<0.000000e+00> : vector<8x128xf32>
    %51 = tpu.matmul %50, %4, %cst_26 {dimension_numbers = #tpu.dot_dimension_numbers<[1], [0], [0], [1], [0, 0, 1, 1], [], []>} : vector<8x128xf32>, vector<128x128xf32>, vector<8x128xf32> -> vector<8x128xf32>
    %52 = arith.mulf %49, %49 : vector<8x128xf32>
    %53 = arith.subf %51, %52 : vector<8x128xf32>
    %cst_27 = arith.constant 0.000000e+00 : f32
    %54 = vector.broadcast %cst_27 : f32 to vector<8x128xf32>
    %55 = arith.maximumf %53, %54 : vector<8x128xf32>
    %56 = arith.subf %48, %49 : vector<8x128xf32>
    %cst_28 = arith.constant 9.99999974E-6 : f32
    %57 = vector.broadcast %cst_28 : f32 to vector<8x128xf32>
    %58 = arith.addf %55, %57 : vector<8x128xf32>
    %59 = math.rsqrt %58 : vector<8x128xf32>
    %60 = arith.mulf %56, %59 : vector<8x128xf32>
    %61 = vector.broadcast %10 : vector<1x128xf32> to vector<8x128xf32>
    %62 = arith.mulf %60, %61 : vector<8x128xf32>
    %63 = vector.broadcast %11 : vector<1x128xf32> to vector<8x128xf32>
    %64 = arith.addf %62, %63 : vector<8x128xf32>
    %65 = arith.truncf %64 : vector<8x128xf32> to vector<8x128xbf16>
    %66 = math.tanh %65 : vector<8x128xbf16>
    %67 = vector.extract_strided_slice %7 {offsets = [0, 384], sizes = [8, 128], strides = [1, 1]} : vector<8x512xf32> to vector<8x128xf32>
    %68 = arith.truncf %67 : vector<8x128xf32> to vector<8x128xbf16>
    %69 = math.tanh %68 : vector<8x128xbf16>
    %70 = arith.subf %66, %2 : vector<8x128xbf16>
    %71 = arith.mulf %43, %70 : vector<8x128xbf16>
    %72 = arith.mulf %69, %71 : vector<8x128xbf16>
    %73 = arith.extf %72 : vector<8x128xbf16> to vector<8x128xf32>
    %74 = arith.addf %0, %73 : vector<8x128xf32>
    %c0_29 = arith.constant 0 : index
    %c0_30 = arith.constant 0 : index
    %75 = vector.load %arg8[%c0_29, %c0_30] : memref<8x128xf32, #tpu.memory_space<vmem>>, vector<8x128xf32>
    tpu.vector_store %arg8[%c0_29, %c0_30], %74 {strides = array<i32>} : memref<8x128xf32, #tpu.memory_space<vmem>>, vector<8x128xf32>,
    return
  }
  func.func @transform_0(%arg0: i32) -> (i32, i32) {
    %c0_i32 = arith.constant 0 : i32
    %c0_i32_0 = arith.constant 0 : i32
    return %arg0, %c0_i32 : i32, i32
  }
  func.func @transform_1(%arg0: i32) -> (i32, i32) {
    %c0_i32 = arith.constant 0 : i32
    %c0_i32_0 = arith.constant 0 : i32
    return %arg0, %c0_i32 : i32, i32
  }
  func.func @transform_2(%arg0: i32) -> (i32, i32) {
    %c0_i32 = arith.constant 0 : i32
    %c0_i32_0 = arith.constant 0 : i32
    %c0_i32_1 = arith.constant 0 : i32
    return %c0_i32, %c0_i32_0 : i32, i32
  }
  func.func @transform_3(%arg0: i32) -> (i32, i32) {
    %c0_i32 = arith.constant 0 : i32
    %c0_i32_0 = arith.constant 0 : i32
    %c0_i32_1 = arith.constant 0 : i32
    return %c0_i32, %c0_i32_0 : i32, i32
  }
  func.func @transform_4(%arg0: i32) -> (i32, i32) {
    %c0_i32 = arith.constant 0 : i32
    %c0_i32_0 = arith.constant 0 : i32
    %c0_i32_1 = arith.constant 0 : i32
    return %c0_i32, %c0_i32_0 : i32, i32
  }
  func.func @transform_5(%arg0: i32) -> (i32, i32) {
    %c0_i32 = arith.constant 0 : i32
    %c0_i32_0 = arith.constant 0 : i32
    %c0_i32_1 = arith.constant 0 : i32
    return %c0_i32, %c0_i32_0 : i32, i32
  }
  func.func @transform_6(%arg0: i32) -> (i32, i32) {
    %c0_i32 = arith.constant 0 : i32
    %c0_i32_0 = arith.constant 0 : i32
    %c0_i32_1 = arith.constant 0 : i32
    return %c0_i32, %c0_i32_0 : i32, i32
  }
  func.func @transform_7(%arg0: i32) -> (i32, i32) {
    %c0_i32 = arith.constant 0 : i32
    %c0_i32_0 = arith.constant 0 : i32
    return %arg0, %c0_i32 : i32, i32
  }
}

</mosaic_0001>

<llo_original>
// kernel: tpu_custom_call.1
$region0: #{tpu_custom_call.1}
  #allocation0 [shape = 'u32[]', space=smem, size = 0x4, offset = 0x4, fixed_abs, tag = 'smem constant byte address 0x4 - core index']
  #allocation1 [shape = 'u32[144,128]{1,0:T(1,128)}', space=vmem, size = 0x12000, scoped, tag = 'internal scratch']
  %s0 = inlined_call_operand.hbm [shape: f32[8,128], index: 0, kind: input, shape index: {}]
  %s1 = inlined_call_operand.hbm [shape: f32[8,8], index: 1, kind: input, shape index: {}]
  %s2 = inlined_call_operand.hbm [shape: bf16[128,256], index: 2, kind: input, shape index: {}]
  %s3 = inlined_call_operand.hbm [shape: bf16[128,128], index: 3, kind: input, shape index: {}]
  %s4 = inlined_call_operand.hbm [shape: f32[256,256], index: 4, kind: input, shape index: {}]
  %s5 = inlined_call_operand.hbm [shape: f32[8,512], index: 5, kind: input, shape index: {}]
  %s6 = inlined_call_operand.vmem [shape: f32[8,256], index: 6, kind: input, shape index: {}]
  %s7 = inlined_call_operand.hbm [shape: f32[8,128], index: 7, kind: output, shape index: {}]
  %s8 = sld [smem:[#allocation0]]
  $region62: #{tpu_custom_call.1} parent=0
    _
  %s10 = ssub.s32 1, %s8
  %s11 = scalar_select 0, %s10, %s8
  $region1: #{tpu_custom_call.1} parent=0
    #allocation2 [shape = 'u8[4096]{0}', space=vmem, size = 0x1000, scoped, tag = 'input window, operand 0, single buffered']
    #allocation3 [shape = 's32[1]{0}', space=sflag, size = 0x4, scoped, tag = 'scoped memory for tpu_custom_call.1']
    #allocation4 [shape = 's32[1]{0}', space=sflag, size = 0x4, scoped, tag = 'scoped memory for tpu_custom_call.1']
    #allocation5 [shape = 'u8[4096]{0}', space=vmem, size = 0x1000, scoped, tag = 'input window, operand 1, single buffered']
    #allocation6 [shape = 's32[1]{0}', space=sflag, size = 0x4, scoped, tag = 'scoped memory for tpu_custom_call.1']
    #allocation7 [shape = 'u8[65536]{0}', space=vmem, size = 0x10000, scoped, tag = 'input window, operand 2, single buffered']
    #allocation8 [shape = 'u8[32768]{0}', space=vmem, size = 0x8000, scoped, tag = 'input window, operand 3, single buffered']
    #allocation9 [shape = 's32[1]{0}', space=sflag, size = 0x4, scoped, tag = 'scoped memory for tpu_custom_call.1']
    #allocation10 [shape = 'u8[262144]{0}', space=vmem, size = 0x40000, scoped, tag = 'input window, operand 4, single buffered']
    #allocation11 [shape = 'u8[16384]{0}', space=vmem, size = 0x4000, scoped, tag = 'input window, operand 5, single buffered']
    #allocation12 [shape = 's32[1]{0}', space=sflag, size = 0x4, scoped, tag = 'scoped memory for tpu_custom_call.1']
    #allocation13 [shape = 'u8[4096]{0}', space=vmem, size = 0x1000, scoped, tag = 'output window, operand 0, single buffered']
    %12 = vsyncpa [#allocation3], 0
    %13 = vsyncpa [#allocation6], 0
    %14 = vsyncpa [#allocation9], 0
    %15 = vsyncpa [#allocation12], 0
    %16 = vsyncpa [#allocation4], 0
    // Predicated region
    $region2: #{tpu_custom_call.1} parent=1 // pred_check
      _
    $region3: #{tpu_custom_call.1} parent=1 // pred_check_branch
      %18 = sbr.rel (0) target = $region5
    $region4: #{tpu_custom_call.1} parent=1 // pred_region
      %s20 = ssub.s32 128, 128
      %21 = vsyncadd [#allocation3], %s20
      %s23 = sshll.u32 [#allocation2], 4
      %s24 = int_to_ptr.vmem [resolvable:$true] %s23
      %26 = dma.hbm_to_vmem [thread:$0]  %s0, 128, %s24, [#allocation3]
    $region5: #{tpu_custom_call.1} parent=1 // pred_fallthru
      _
    // Predicated region
    $region6: #{tpu_custom_call.1} parent=1 // pred_check
      _
    $region7: #{tpu_custom_call.1} parent=1 // pred_check_branch
      %28 = sbr.rel (0) target = $region9
    $region8: #{tpu_custom_call.1} parent=1 // pred_region
      %s30 = ssub.s32 128, 128
      %31 = vsyncadd [#allocation6], %s30
      %s33 = sshll.u32 [#allocation5], 4
      %s34 = int_to_ptr.vmem [resolvable:$true] %s33
      %36 = dma.hbm_to_vmem [thread:$0]  %s1, 128, %s34, [#allocation6]
    $region9: #{tpu_custom_call.1} parent=1 // pred_fallthru
      _
    // Predicated region
    $region10: #{tpu_custom_call.1} parent=1 // pred_check
      _
    $region11: #{tpu_custom_call.1} parent=1 // pred_check_branch
      %38 = sbr.rel (0) target = $region13
    $region12: #{tpu_custom_call.1} parent=1 // pred_region
      %s40 = ssub.s32 2048, 2048
      %41 = vsyncadd [#allocation6], %s40
      %s42 = sshll.u32 [#allocation7], 4
      %s43 = int_to_ptr.vmem [resolvable:$true] %s42
      %48 = dma.hbm_to_vmem [thread:$0]  %s2, 2048, %s43, [#allocation6], 128, 128, 8
    $region13: #{tpu_custom_call.1} parent=1 // pred_fallthru
      _
    // Predicated region
    $region14: #{tpu_custom_call.1} parent=1 // pred_check
      _
    $region15: #{tpu_custom_call.1} parent=1 // pred_check_branch
      %50 = sbr.rel (0) target = $region17
    $region16: #{tpu_custom_call.1} parent=1 // pred_region
      %s52 = ssub.s32 1024, 1024
      %53 = vsyncadd [#allocation9], %s52
      %s54 = sshll.u32 [#allocation8], 4
      %s55 = int_to_ptr.vmem [resolvable:$true] %s54
      %60 = dma.hbm_to_vmem [thread:$0]  %s3, 1024, %s55, [#allocation9], 64, 64, 4
    $region17: #{tpu_custom_call.1} parent=1 // pred_fallthru
      _
    // Predicated region
    $region18: #{tpu_custom_call.1} parent=1 // pred_check
      _
    $region19: #{tpu_custom_call.1} parent=1 // pred_check_branch
      %62 = sbr.rel (0) target = $region21
    $region20: #{tpu_custom_call.1} parent=1 // pred_region
      %s64 = ssub.s32 8192, 8192
      %65 = vsyncadd [#allocation9], %s64
      %s66 = sshll.u32 [#allocation10], 4
      %s67 = int_to_ptr.vmem [resolvable:$true] %s66
      %72 = dma.hbm_to_vmem [thread:$0]  %s4, 8192, %s67, [#allocation9], 256, 256, 16
    $region21: #{tpu_custom_call.1} parent=1 // pred_fallthru
      _
    // Predicated region
    $region22: #{tpu_custom_call.1} parent=1 // pred_check
      _
    $region23: #{tpu_custom_call.1} parent=1 // pred_check_branch
      %74 = sbr.rel (0) target = $region25
    $region24: #{tpu_custom_call.1} parent=1 // pred_region
      %s76 = ssub.s32 512, 512
      %77 = vsyncadd [#allocation12], %s76
      %s79 = sshll.u32 [#allocation11], 4
      %s80 = int_to_ptr.vmem [resolvable:$true] %s79
      %82 = dma.hbm_to_vmem [thread:$0]  %s5, 512, %s80, [#allocation12]
    $region25: #{tpu_custom_call.1} parent=1 // pred_fallthru
      _
    // Predicated region
    $region26: #{tpu_custom_call.1} parent=1 // pred_check
      _
    $region27: #{tpu_custom_call.1} parent=1 // pred_check_branch
      %84 = sbr.rel (0) target = $region29
    $region28: #{tpu_custom_call.1} parent=1 // pred_region
      _
    $region29: #{tpu_custom_call.1} parent=1 // pred_fallthru
      _
    // Predicated region
    $region30: #{tpu_custom_call.1} parent=1 // pred_check
      _
    $region31: #{tpu_custom_call.1} parent=1 // pred_check_branch
      %86 = sbr.rel (0) target = $region33
    $region32: #{tpu_custom_call.1} parent=1 // pred_region
      %87 = dma.done [#allocation3], 128
    $region33: #{tpu_custom_call.1} parent=1 // pred_fallthru
      _
    // Predicated region
    $region34: #{tpu_custom_call.1} parent=1 // pred_check
      _
    $region35: #{tpu_custom_call.1} parent=1 // pred_check_branch
      %89 = sbr.rel (0) target = $region37
    $region36: #{tpu_custom_call.1} parent=1 // pred_region
      %90 = dma.done [#allocation6], 128
    $region37: #{tpu_custom_call.1} parent=1 // pred_fallthru
      _
    // Predicated region
    $region38: #{tpu_custom_call.1} parent=1 // pred_check
      _
    $region39: #{tpu_custom_call.1} parent=1 // pred_check_branch
      %92 = sbr.rel (0) target = $region41
    $region40: #{tpu_custom_call.1} parent=1 // pred_region
      %93 = dma.done [#allocation6], 2048
    $region41: #{tpu_custom_call.1} parent=1 // pred_fallthru
      _
    // Predicated region
    $region42: #{tpu_custom_call.1} parent=1 // pred_check
      _
    $region43: #{tpu_custom_call.1} parent=1 // pred_check_branch
      %95 = sbr.rel (0) target = $region45
    $region44: #{tpu_custom_call.1} parent=1 // pred_region
      %96 = dma.done [#allocation9], 1024
    $region45: #{tpu_custom_call.1} parent=1 // pred_fallthru
      _
    // Predicated region
    $region46: #{tpu_custom_call.1} parent=1 // pred_check
      _
    $region47: #{tpu_custom_call.1} parent=1 // pred_check_branch
      %98 = sbr.rel (0) target = $region49
    $region48: #{tpu_custom_call.1} parent=1 // pred_region
      %99 = dma.done [#allocation9], 8192
    $region49: #{tpu_custom_call.1} parent=1 // pred_fallthru
      _
    // Predicated region
    $region50: #{tpu_custom_call.1} parent=1 // pred_check
      _
    $region51: #{tpu_custom_call.1} parent=1 // pred_check_branch
      %101 = sbr.rel (0) target = $region53
    $region52: #{tpu_custom_call.1} parent=1 // pred_region
      %102 = dma.done [#allocation12], 512
    $region53: #{tpu_custom_call.1} parent=1 // pred_fallthru
      _
    %v107 = vld [vmem:[#allocation2] sm:$0xff]
    %v108 = vpack.c.bf16 %v107, %v107
    %v109 = vld [vmem:[#allocation10] sm:$0xff]
    %v110 = vld [vmem:[#allocation10 + $0x8] sm:$0xff]
    %v111 = vld [vmem:[#allocation10 + $0x10] sm:$0xff]
    %v112 = vld [vmem:[#allocation10 + $0x18] sm:$0xff]
    %v113 = vld [vmem:[#allocation10 + $0x20] sm:$0xff]
    %v114 = vld [vmem:[#allocation10 + $0x28] sm:$0xff]
    %v115 = vld [vmem:[#allocation10 + $0x30] sm:$0xff]
    %v116 = vld [vmem:[#allocation10 + $0x38] sm:$0xff]
    %v117 = vld [vmem:[#allocation10 + $0x40] sm:$0xff]
    %v118 = vld [vmem:[#allocation10 + $0x48] sm:$0xff]
    %v119 = vld [vmem:[#allocation10 + $0x50] sm:$0xff]
    %v120 = vld [vmem:[#allocation10 + $0x58] sm:$0xff]
    %v121 = vld [vmem:[#allocation10 + $0x60] sm:$0xff]
    %v122 = vld [vmem:[#allocation10 + $0x68] sm:$0xff]
    %v123 = vld [vmem:[#allocation10 + $0x70] sm:$0xff]
    %v124 = vld [vmem:[#allocation10 + $0x78] sm:$0xff]
    %v125 = vld [vmem:[#allocation10 + $0x80] sm:$0xff]
    %v126 = vld [vmem:[#allocation10 + $0x88] sm:$0xff]
    %v127 = vld [vmem:[#allocation10 + $0x90] sm:$0xff]
    %v128 = vld [vmem:[#allocation10 + $0x98] sm:$0xff]
    %v129 = vld [vmem:[#allocation10 + $0xa0] sm:$0xff]
    %v130 = vld [vmem:[#allocation10 + $0xa8] sm:$0xff]
    %v131 = vld [vmem:[#allocation10 + $0xb0] sm:$0xff]
    %v132 = vld [vmem:[#allocation10 + $0xb8] sm:$0xff]
    %v133 = vld [vmem:[#allocation10 + $0xc0] sm:$0xff]
    %v134 = vld [vmem:[#allocation10 + $0xc8] sm:$0xff]
    %v135 = vld [vmem:[#allocation10 + $0xd0] sm:$0xff]
    %v136 = vld [vmem:[#allocation10 + $0xd8] sm:$0xff]
    %v137 = vld [vmem:[#allocation10 + $0xe0] sm:$0xff]
    %v138 = vld [vmem:[#allocation10 + $0xe8] sm:$0xff]
    %v139 = vld [vmem:[#allocation10 + $0xf0] sm:$0xff]
    %v140 = vld [vmem:[#allocation10 + $0xf8] sm:$0xff]
    %v141 = vld [vmem:[#allocation10 + $0x100] sm:$0xff]
    %v142 = vld [vmem:[#allocation10 + $0x108] sm:$0xff]
    %v143 = vld [vmem:[#allocation10 + $0x110] sm:$0xff]
    %v144 = vld [vmem:[#allocation10 + $0x118] sm:$0xff]
    %v145 = vld [vmem:[#allocation10 + $0x120] sm:$0xff]
    %v146 = vld [vmem:[#allocation10 + $0x128] sm:$0xff]
    %v147 = vld [vmem:[#allocation10 + $0x130] sm:$0xff]
    %v148 = vld [vmem:[#allocation10 + $0x138] sm:$0xff]
    %v149 = vld [vmem:[#allocation10 + $0x140] sm:$0xff]
    %v150 = vld [vmem:[#allocation10 + $0x148] sm:$0xff]
    %v151 = vld [vmem:[#allocation10 + $0x150] sm:$0xff]
    %v152 = vld [vmem:[#allocation10 + $0x158] sm:$0xff]
    %v153 = vld [vmem:[#allocation10 + $0x160] sm:$0xff]
    %v154 = vld [vmem:[#allocation10 + $0x168] sm:$0xff]
    %v155 = vld [vmem:[#allocation10 + $0x170] sm:$0xff]
    %v156 = vld [vmem:[#allocation10 + $0x178] sm:$0xff]
    %v157 = vld [vmem:[#allocation10 + $0x180] sm:$0xff]
    %v158 = vld [vmem:[#allocation10 + $0x188] sm:$0xff]
    %v159 = vld [vmem:[#allocation10 + $0x190] sm:$0xff]
    %v160 = vld [vmem:[#allocation10 + $0x198] sm:$0xff]
    %v161 = vld [vmem:[#allocation10 + $0x1a0] sm:$0xff]
    %v162 = vld [vmem:[#allocation10 + $0x1a8] sm:$0xff]
    %v163 = vld [vmem:[#allocation10 + $0x1b0] sm:$0xff]
    %v164 = vld [vmem:[#allocation10 + $0x1b8] sm:$0xff]
    %v165 = vld [vmem:[#allocation10 + $0x1c0] sm:$0xff]
    %v166 = vld [vmem:[#allocation10 + $0x1c8] sm:$0xff]
    %v167 = vld [vmem:[#allocation10 + $0x1d0] sm:$0xff]
    %v168 = vld [vmem:[#allocation10 + $0x1d8] sm:$0xff]
    %v169 = vld [vmem:[#allocation10 + $0x1e0] sm:$0xff]
    %v170 = vld [vmem:[#allocation10 + $0x1e8] sm:$0xff]
    %v171 = vld [vmem:[#allocation10 + $0x1f0] sm:$0xff]
    %v172 = vld [vmem:[#allocation10 + $0x1f8] sm:$0xff]
    %v173 = vld [vmem:[#allocation5] sm:$0xff]
    %v174 = vld [vmem:[#allocation11] sm:$0xff]
    %v175 = vld [vmem:[#allocation11 + $0x8] sm:$0xff]
    %v176 = vld [vmem:[#allocation11 + $0x10] sm:$0xff]
    %v177 = vld [vmem:[#allocation11 + $0x18] sm:$0xff]
    %vm178 = vcmask 64512
    %v180 = vsel %vm178, %v173, 0
    %182 = vmatprep.subr.mxu0 %v175
    %183 = vmatpush1.msra.mxu0 %v174
    %184 = vmatprep.subr.mxu0 0.0
    %185 = vmatpush1.msra.mxu0 0.0
    %186 = vmatprep.subr.mxu0 0.0
    %187 = vmatpush1.msra.mxu0 0.0
    %188 = vmatprep.subr.mxu0 0.0
    %189 = vmatpush1.msra.mxu0 0.0
    %190 = vmatprep.subr.mxu0 0.0
    %191 = vmatpush1.msra.mxu0 0.0
    %192 = vmatprep.subr.mxu0 0.0
    %193 = vmatpush1.msra.mxu0 0.0
    %194 = vmatprep.subr.mxu0 0.0
    %195 = vmatpush1.msra.mxu0 0.0
    %196 = vmatprep.subr.mxu0 0.0
    %197 = vmatpush1.msra.mxu0 0.0
    %198 = vmatprep.subr.mxu0 0.0
    %199 = vmatpush1.msra.mxu0 0.0
    %200 = vmatprep.subr.mxu0 0.0
    %201 = vmatpush1.msra.mxu0 0.0
    %202 = vmatprep.subr.mxu0 0.0
    %203 = vmatpush1.msra.mxu0 0.0
    %204 = vmatprep.subr.mxu0 0.0
    %205 = vmatpush1.msra.mxu0 0.0
    %206 = vmatprep.subr.mxu0 0.0
    %207 = vmatpush1.msra.mxu0 0.0
    %208 = vmatprep.subr.mxu0 0.0
    %209 = vmatpush1.msra.mxu0 0.0
    %210 = vmatprep.subr.mxu0 0.0
    %211 = vmatpush1.msra.mxu0 0.0
    %212 = vmatprep.subr.mxu0 0.0
    %213 = vmatpush1.msra.mxu0 0.0
    %214 = vmatprep.subr.mxu0 0.0
    %215 = vmatpush1.msra.mxu0 0.0
    %216 = vmatprep.subr.mxu0 0.0
    %217 = vmatpush1.msra.mxu0 0.0
    %218 = vmatprep.subr.mxu0 0.0
    %219 = vmatpush1.msra.mxu0 0.0
    %220 = vmatprep.subr.mxu0 0.0
    %221 = vmatpush1.msra.mxu0 0.0
    %222 = vmatprep.subr.mxu0 0.0
    %223 = vmatpush1.msra.mxu0 0.0
    %224 = vmatprep.subr.mxu0 0.0
    %225 = vmatpush1.msra.mxu0 0.0
    %226 = vmatprep.subr.mxu0 0.0
    %227 = vmatpush1.msra.mxu0 0.0
    %228 = vmatprep.subr.mxu0 0.0
    %229 = vmatpush1.msra.mxu0 0.0
    %230 = vmatprep.subr.mxu0 0.0
    %231 = vmatpush1.msra.mxu0 0.0
    %232 = vmatprep.subr.mxu0 0.0
    %233 = vmatpush1.msra.mxu0 0.0
    %234 = vmatprep.subr.mxu0 0.0
    %235 = vmatpush1.msra.mxu0 0.0
    %236 = vmatprep.subr.mxu0 0.0
    %237 = vmatpush1.msra.mxu0 0.0
    %238 = vmatprep.subr.mxu0 0.0
    %239 = vmatpush1.msra.mxu0 0.0
    %240 = vmatprep.subr.mxu0 0.0
    %241 = vmatpush1.msra.mxu0 0.0
    %242 = vmatprep.subr.mxu0 0.0
    %243 = vmatpush1.msra.mxu0 0.0
    %244 = vmatprep.subr.mxu0 0.0
    %245 = vmatpush1.msra.mxu0 0.0
    %246 = vmatprep.mubr.f32.mxu0 0.0
    %247 = vmatmul.mubr.f32.gmra.mrb[0].mxu0 %v180
    %v248 = vpop.f32.mrb[0].mxu0
    %v249 = vadd.f32 0.0, %v248
    %v250 = vpop.f32.mrb[0].mxu0
    %v251 = vadd.f32 0.0, %v250
    %252 = vdwg.mxu0
    %253 = vmatprep.subr.mxu0 %v177
    %254 = vmatpush1.msra.mxu0 %v176
    %255 = vmatprep.subr.mxu0 0.0
    %256 = vmatpush1.msra.mxu0 0.0
    %257 = vmatprep.subr.mxu0 0.0
    %258 = vmatpush1.msra.mxu0 0.0
    %259 = vmatprep.subr.mxu0 0.0
    %260 = vmatpush1.msra.mxu0 0.0
    %261 = vmatprep.subr.mxu0 0.0
    %262 = vmatpush1.msra.mxu0 0.0
    %263 = vmatprep.subr.mxu0 0.0
    %264 = vmatpush1.msra.mxu0 0.0
    %265 = vmatprep.subr.mxu0 0.0
    %266 = vmatpush1.msra.mxu0 0.0
    %267 = vmatprep.subr.mxu0 0.0
    %268 = vmatpush1.msra.mxu0 0.0
    %269 = vmatprep.subr.mxu0 0.0
    %270 = vmatpush1.msra.mxu0 0.0
    %271 = vmatprep.subr.mxu0 0.0
    %272 = vmatpush1.msra.mxu0 0.0
    %273 = vmatprep.subr.mxu0 0.0
    %274 = vmatpush1.msra.mxu0 0.0
    %275 = vmatprep.subr.mxu0 0.0
    %276 = vmatpush1.msra.mxu0 0.0
    %277 = vmatprep.subr.mxu0 0.0
    %278 = vmatpush1.msra.mxu0 0.0
    %279 = vmatprep.subr.mxu0 0.0
    %280 = vmatpush1.msra.mxu0 0.0
    %281 = vmatprep.subr.mxu0 0.0
    %282 = vmatpush1.msra.mxu0 0.0
    %283 = vmatprep.subr.mxu0 0.0
    %284 = vmatpush1.msra.mxu0 0.0
    %285 = vmatprep.subr.mxu0 0.0
    %286 = vmatpush1.msra.mxu0 0.0
    %287 = vmatprep.subr.mxu0 0.0
    %288 = vmatpush1.msra.mxu0 0.0
    %289 = vmatprep.subr.mxu0 0.0
    %290 = vmatpush1.msra.mxu0 0.0
    %291 = vmatprep.subr.mxu0 0.0
    %292 = vmatpush1.msra.mxu0 0.0
    %293 = vmatprep.subr.mxu0 0.0
    %294 = vmatpush1.msra.mxu0 0.0
    %295 = vmatprep.subr.mxu0 0.0
    %296 = vmatpush1.msra.mxu0 0.0
    %297 = vmatprep.subr.mxu0 0.0
    %298 = vmatpush1.msra.mxu0 0.0
    %299 = vmatprep.subr.mxu0 0.0
    %300 = vmatpush1.msra.mxu0 0.0
    %301 = vmatprep.subr.mxu0 0.0
    %302 = vmatpush1.msra.mxu0 0.0
    %303 = vmatprep.subr.mxu0 0.0
    %304 = vmatpush1.msra.mxu0 0.0
    %305 = vmatprep.subr.mxu0 0.0
    %306 = vmatpush1.msra.mxu0 0.0
    %307 = vmatprep.subr.mxu0 0.0
    %308 = vmatpush1.msra.mxu0 0.0
    %309 = vmatprep.subr.mxu0 0.0
    %310 = vmatpush1.msra.mxu0 0.0
    %311 = vmatprep.subr.mxu0 0.0
    %312 = vmatpush1.msra.mxu0 0.0
    %313 = vmatprep.subr.mxu0 0.0
    %314 = vmatpush1.msra.mxu0 0.0
    %315 = vmatprep.subr.mxu0 0.0
    %316 = vmatpush1.msra.mxu0 0.0
    %317 = vmatprep.mubr.f32.mxu0 0.0
    %318 = vmatmul.mubr.f32.gmra.mrb[0].mxu0 %v180
    %v319 = vpop.f32.mrb[0].mxu0
    %v320 = vadd.f32 0.0, %v319
    %v321 = vpop.f32.mrb[0].mxu0
    %v322 = vadd.f32 0.0, %v321
    %323 = vdwg.mxu0
    %v324 = vld [vmem:[%s6] ss:$8 sm:$0x3]
    %s325 = scalar_lea.vmem %s6, 1
    %v326 = vld [vmem:[%s325] ss:$8 sm:$0x3]
    %v327 = vld [vmem:[%s6 + $0x2] ss:$0 sm:$0xff]
    %v328 = vld [vmem:[%s6 + $0x3] ss:$0 sm:$0xff]
    %v329 = vld [vmem:[#allocation7] sm:$0xff]
    %v330 = vld [vmem:[#allocation7 + $0x8] sm:$0xff]
    %v331 = vld [vmem:[#allocation7 + $0x10] sm:$0xff]
    %v332 = vld [vmem:[#allocation7 + $0x18] sm:$0xff]
    %v333 = vld [vmem:[#allocation7 + $0x20] sm:$0xff]
    %v334 = vld [vmem:[#allocation7 + $0x28] sm:$0xff]
    %v335 = vld [vmem:[#allocation7 + $0x30] sm:$0xff]
    %v336 = vld [vmem:[#allocation7 + $0x38] sm:$0xff]
    %v337 = vld [vmem:[#allocation7 + $0x40] sm:$0xff]
    %v338 = vld [vmem:[#allocation7 + $0x48] sm:$0xff]
    %v339 = vld [vmem:[#allocation7 + $0x50] sm:$0xff]
    %v340 = vld [vmem:[#allocation7 + $0x58] sm:$0xff]
    %v341 = vld [vmem:[#allocation7 + $0x60] sm:$0xff]
    %v342 = vld [vmem:[#allocation7 + $0x68] sm:$0xff]
    %v343 = vld [vmem:[#allocation7 + $0x70] sm:$0xff]
    %v344 = vld [vmem:[#allocation7 + $0x78] sm:$0xff]
    %v361 = vunpack.c.l.b16 %v329
    %v362 = vunpack.c.h.b16 %v329
    %v363 = vunpack.c.l.b16 %v330
    %v364 = vunpack.c.h.b16 %v330
    %v365 = vunpack.c.l.b16 %v331
    %v366 = vunpack.c.h.b16 %v331
    %v367 = vunpack.c.l.b16 %v332
    %v368 = vunpack.c.h.b16 %v332
    %v369 = vunpack.c.l.b16 %v333
    %v370 = vunpack.c.h.b16 %v333
    %v371 = vunpack.c.l.b16 %v334
    %v372 = vunpack.c.h.b16 %v334
    %v373 = vunpack.c.l.b16 %v335
    %v374 = vunpack.c.h.b16 %v335
    %v375 = vunpack.c.l.b16 %v336
    %v376 = vunpack.c.h.b16 %v336
    %v377 = vunpack.c.l.b16 %v337
    %v378 = vunpack.c.h.b16 %v337
    %v379 = vunpack.c.l.b16 %v338
    %v380 = vunpack.c.h.b16 %v338
    %v381 = vunpack.c.l.b16 %v339
    %v382 = vunpack.c.h.b16 %v339
    %v383 = vunpack.c.l.b16 %v340
    %v384 = vunpack.c.h.b16 %v340
    %v385 = vunpack.c.l.b16 %v341
    %v386 = vunpack.c.h.b16 %v341
    %v387 = vunpack.c.l.b16 %v342
    %v388 = vunpack.c.h.b16 %v342
    %v389 = vunpack.c.l.b16 %v343
    %v390 = vunpack.c.h.b16 %v343
    %v391 = vunpack.c.l.b16 %v344
    %v392 = vunpack.c.h.b16 %v344
    %v393 = vpack.c.b16 %v363, %v361
    %v394 = vpack.c.b16 %v364, %v362
    %v395 = vpack.c.b16 %v367, %v365
    %v396 = vpack.c.b16 %v368, %v366
    %v397 = vpack.c.b16 %v371, %v369
    %v398 = vpack.c.b16 %v372, %v370
    %v399 = vpack.c.b16 %v375, %v373
    %v400 = vpack.c.b16 %v376, %v374
    %v401 = vpack.c.b16 %v379, %v377
    %v402 = vpack.c.b16 %v380, %v378
    %v403 = vpack.c.b16 %v383, %v381
    %v404 = vpack.c.b16 %v384, %v382
    %v405 = vpack.c.b16 %v387, %v385
    %v406 = vpack.c.b16 %v388, %v386
    %v407 = vpack.c.b16 %v391, %v389
    %v408 = vpack.c.b16 %v392, %v390
    %425 = vmatprep.subr.bf16.mxu0 %v394
    %426 = vmatpush1.bf16.msra.mxu0 %v393
    %427 = vmatprep.subr.bf16.mxu0 %v396
    %428 = vmatpush1.bf16.msra.mxu0 %v395
    %429 = vmatprep.subr.bf16.mxu0 %v398
    %430 = vmatpush1.bf16.msra.mxu0 %v397
    %431 = vmatprep.subr.bf16.mxu0 %v400
    %432 = vmatpush1.bf16.msra.mxu0 %v399
    %433 = vmatprep.subr.bf16.mxu0 %v402
    %434 = vmatpush1.bf16.msra.mxu0 %v401
    %435 = vmatprep.subr.bf16.mxu0 %v404
    %436 = vmatpush1.bf16.msra.mxu0 %v403
    %437 = vmatprep.subr.bf16.mxu0 %v406
    %438 = vmatpush1.bf16.msra.mxu0 %v405
    %439 = vmatprep.subr.bf16.mxu0 %v408
    %440 = vmatpush1.bf16.msra.mxu0 %v407
    %441 = vmatprep.subr.bf16.mxu0 0
    %442 = vmatpush1.bf16.msra.mxu0 0
    %443 = vmatprep.subr.bf16.mxu0 0
    %444 = vmatpush1.bf16.msra.mxu0 0
    %445 = vmatprep.subr.bf16.mxu0 0
    %446 = vmatpush1.bf16.msra.mxu0 0
    %447 = vmatprep.subr.bf16.mxu0 0
    %448 = vmatpush1.bf16.msra.mxu0 0
    %449 = vmatprep.subr.bf16.mxu0 0
    %450 = vmatpush1.bf16.msra.mxu0 0
    %451 = vmatprep.subr.bf16.mxu0 0
    %452 = vmatpush1.bf16.msra.mxu0 0
    %453 = vmatprep.subr.bf16.mxu0 0
    %454 = vmatpush1.bf16.msra.mxu0 0
    %455 = vmatprep.subr.bf16.mxu0 0
    %456 = vmatpush1.bf16.msra.mxu0 0
    %457 = vmatprep.mubr.bf16.mxu0 0
    %458 = vmatmul.mubr.bf16.gmra.mrb[0].mxu0 %v108
    %v459 = vpop.f32.mrb[0].mxu0
    %v460 = vadd.f32 %v249, %v459
    %v461 = vpop.f32.mrb[0].mxu0
    %v462 = vadd.f32 %v251, %v461
    %v463 = vpop.f32.mrb[0].mxu0
    %v464 = vpop.f32.mrb[0].mxu0
    %465 = vdwg.mxu0
    %466 = vmatprep.subr.mxu0 %v110
    %467 = vmatpush1.msra.mxu0 %v109
    %468 = vmatprep.subr.mxu0 %v112
    %469 = vmatpush1.msra.mxu0 %v111
    %470 = vmatprep.subr.mxu0 %v114
    %471 = vmatpush1.msra.mxu0 %v113
    %472 = vmatprep.subr.mxu0 %v116
    %473 = vmatpush1.msra.mxu0 %v115
    %474 = vmatprep.subr.mxu0 %v118
    %475 = vmatpush1.msra.mxu0 %v117
    %476 = vmatprep.subr.mxu0 %v120
    %477 = vmatpush1.msra.mxu0 %v119
    %478 = vmatprep.subr.mxu0 %v122
    %479 = vmatpush1.msra.mxu0 %v121
    %480 = vmatprep.subr.mxu0 %v124
    %481 = vmatpush1.msra.mxu0 %v123
    %482 = vmatprep.subr.mxu0 %v126
    %483 = vmatpush1.msra.mxu0 %v125
    %484 = vmatprep.subr.mxu0 %v128
    %485 = vmatpush1.msra.mxu0 %v127
    %486 = vmatprep.subr.mxu0 %v130
    %487 = vmatpush1.msra.mxu0 %v129
    %488 = vmatprep.subr.mxu0 %v132
    %489 = vmatpush1.msra.mxu0 %v131
    %490 = vmatprep.subr.mxu0 %v134
    %491 = vmatpush1.msra.mxu0 %v133
    %492 = vmatprep.subr.mxu0 %v136
    %493 = vmatpush1.msra.mxu0 %v135
    %494 = vmatprep.subr.mxu0 %v138
    %495 = vmatpush1.msra.mxu0 %v137
    %496 = vmatprep.subr.mxu0 %v140
    %497 = vmatpush1.msra.mxu0 %v139
    %498 = vmatprep.subr.mxu0 %v142
    %499 = vmatpush1.msra.mxu0 %v141
    %500 = vmatprep.subr.mxu0 %v144
    %501 = vmatpush1.msra.mxu0 %v143
    %502 = vmatprep.subr.mxu0 %v146
    %503 = vmatpush1.msra.mxu0 %v145
    %504 = vmatprep.subr.mxu0 %v148
    %505 = vmatpush1.msra.mxu0 %v147
    %506 = vmatprep.subr.mxu0 %v150
    %507 = vmatpush1.msra.mxu0 %v149
    %508 = vmatprep.subr.mxu0 %v152
    %509 = vmatpush1.msra.mxu0 %v151
    %510 = vmatprep.subr.mxu0 %v154
    %511 = vmatpush1.msra.mxu0 %v153
    %512 = vmatprep.subr.mxu0 %v156
    %513 = vmatpush1.msra.mxu0 %v155
    %514 = vmatprep.subr.mxu0 %v158
    %515 = vmatpush1.msra.mxu0 %v157
    %516 = vmatprep.subr.mxu0 %v160
    %517 = vmatpush1.msra.mxu0 %v159
    %518 = vmatprep.subr.mxu0 %v162
    %519 = vmatpush1.msra.mxu0 %v161
    %520 = vmatprep.subr.mxu0 %v164
    %521 = vmatpush1.msra.mxu0 %v163
    %522 = vmatprep.subr.mxu0 %v166
    %523 = vmatpush1.msra.mxu0 %v165
    %524 = vmatprep.subr.mxu0 %v168
    %525 = vmatpush1.msra.mxu0 %v167
    %526 = vmatprep.subr.mxu0 %v170
    %527 = vmatpush1.msra.mxu0 %v169
    %528 = vmatprep.subr.mxu0 %v172
    %529 = vmatpush1.msra.mxu0 %v171
    %530 = vmatprep.mubr.f32.mxu0 %v462
    %531 = vmatmul.mubr.f32.gmra.mrb[0].mxu0 %v460
    %v532 = vpop.f32.mrb[0].mxu0
    %v533 = vadd.f32 0.0, %v532
    %v534 = vpop.f32.mrb[0].mxu0
    %v535 = vadd.f32 0.0, %v534
    %536 = vdwg.mxu0
    %v537 = vmul.f32 %v460, %v460
    %v538 = vmul.f32 %v462, %v462
    %539 = vmatprep.subr.mxu0 %v110
    %540 = vmatpush1.msra.mxu0 %v109
    %541 = vmatprep.subr.mxu0 %v112
    %542 = vmatpush1.msra.mxu0 %v111
    %543 = vmatprep.subr.mxu0 %v114
    %544 = vmatpush1.msra.mxu0 %v113
    %545 = vmatprep.subr.mxu0 %v116
    %546 = vmatpush1.msra.mxu0 %v115
    %547 = vmatprep.subr.mxu0 %v118
    %548 = vmatpush1.msra.mxu0 %v117
    %549 = vmatprep.subr.mxu0 %v120
    %550 = vmatpush1.msra.mxu0 %v119
    %551 = vmatprep.subr.mxu0 %v122
    %552 = vmatpush1.msra.mxu0 %v121
    %553 = vmatprep.subr.mxu0 %v124
    %554 = vmatpush1.msra.mxu0 %v123
    %555 = vmatprep.subr.mxu0 %v126
    %556 = vmatpush1.msra.mxu0 %v125
    %557 = vmatprep.subr.mxu0 %v128
    %558 = vmatpush1.msra.mxu0 %v127
    %559 = vmatprep.subr.mxu0 %v130
    %560 = vmatpush1.msra.mxu0 %v129
    %561 = vmatprep.subr.mxu0 %v132
    %562 = vmatpush1.msra.mxu0 %v131
    %563 = vmatprep.subr.mxu0 %v134
    %564 = vmatpush1.msra.mxu0 %v133
    %565 = vmatprep.subr.mxu0 %v136
    %566 = vmatpush1.msra.mxu0 %v135
    %567 = vmatprep.subr.mxu0 %v138
    %568 = vmatpush1.msra.mxu0 %v137
    %569 = vmatprep.subr.mxu0 %v140
    %570 = vmatpush1.msra.mxu0 %v139
    %571 = vmatprep.subr.mxu0 %v142
    %572 = vmatpush1.msra.mxu0 %v141
    %573 = vmatprep.subr.mxu0 %v144
    %574 = vmatpush1.msra.mxu0 %v143
    %575 = vmatprep.subr.mxu0 %v146
    %576 = vmatpush1.msra.mxu0 %v145
    %577 = vmatprep.subr.mxu0 %v148
    %578 = vmatpush1.msra.mxu0 %v147
    %579 = vmatprep.subr.mxu0 %v150
    %580 = vmatpush1.msra.mxu0 %v149
    %581 = vmatprep.subr.mxu0 %v152
    %582 = vmatpush1.msra.mxu0 %v151
    %583 = vmatprep.subr.mxu0 %v154
    %584 = vmatpush1.msra.mxu0 %v153
    %585 = vmatprep.subr.mxu0 %v156
    %586 = vmatpush1.msra.mxu0 %v155
    %587 = vmatprep.subr.mxu0 %v158
    %588 = vmatpush1.msra.mxu0 %v157
    %589 = vmatprep.subr.mxu0 %v160
    %590 = vmatpush1.msra.mxu0 %v159
    %591 = vmatprep.subr.mxu0 %v162
    %592 = vmatpush1.msra.mxu0 %v161
    %593 = vmatprep.subr.mxu0 %v164
    %594 = vmatpush1.msra.mxu0 %v163
    %595 = vmatprep.subr.mxu0 %v166
    %596 = vmatpush1.msra.mxu0 %v165
    %597 = vmatprep.subr.mxu0 %v168
    %598 = vmatpush1.msra.mxu0 %v167
    %599 = vmatprep.subr.mxu0 %v170
    %600 = vmatpush1.msra.mxu0 %v169
    %601 = vmatprep.subr.mxu0 %v172
    %602 = vmatpush1.msra.mxu0 %v171
    %603 = vmatprep.mubr.f32.mxu0 %v538
    %604 = vmatmul.mubr.f32.gmra.mrb[0].mxu0 %v537
    %v605 = vpop.f32.mrb[0].mxu0
    %v606 = vadd.f32 0.0, %v605
    %v607 = vpop.f32.mrb[0].mxu0
    %v608 = vadd.f32 0.0, %v607
    %609 = vdwg.mxu0
    %v610 = vmul.f32 %v533, %v533
    %v611 = vmul.f32 %v535, %v535
    %v612 = vsub.f32 %v606, %v610
    %v613 = vsub.f32 %v608, %v611
    %v614 = vmax.f32 %v612, 0.0
    %v615 = vmax.f32 %v613, 0.0
    %v616 = vsub.f32 %v460, %v533
    %v617 = vsub.f32 %v462, %v535
    %v618 = vadd.f32 %v614, 1e-05
    %v619 = vadd.f32 %v615, 1e-05
    %v620 = vrsqrt.pop %v618
    %v621 = vrsqrt.pop %v619
    %v622 = vmul.f32 %v616, %v620
    %v623 = vmul.f32 %v617, %v621
    %v625 = vlaneseq
    %v626 = vshrl.u32 %v625, 7
    %v627 = vsub.s32 0, %v626
    %v628 = vrot.slane %v324, %v627
    %v629 = vlaneseq
    %v630 = vshrl.u32 %v629, 7
    %v631 = vsub.s32 1, %v630
    %v632 = vrot.slane %v324, %v631
    %v635 = vmul.f32 %v622, %v628
    %v636 = vmul.f32 %v623, %v632
    %v638 = vlaneseq
    %v639 = vshrl.u32 %v638, 7
    %v640 = vsub.s32 0, %v639
    %v641 = vrot.slane %v326, %v640
    %v642 = vlaneseq
    %v643 = vshrl.u32 %v642, 7
    %v644 = vsub.s32 1, %v643
    %v645 = vrot.slane %v326, %v644
    %v648 = vadd.f32 %v635, %v641
    %v649 = vadd.f32 %v636, %v645
    %v650 = vpack.c.bf16 %v648, %v648
    %v651 = vpack.c.bf16 %v649, %v649
    %v652 = vxor.u32 %v650, 2147516416
    %v653 = vxor.u32 %v651, 2147516416
    %v655 = vmul.bf16 %v652, 1069105081
    %v656 = vpow.bf16.pop %v655
    %v658 = vmul.bf16 %v653, 1069105081
    %v659 = vpow.bf16.pop %v658
    %v660 = vadd.bf16 %v656, 1065369472
    %v661 = vadd.bf16 %v659, 1065369472
    %v662 = vrcp.bf16.pop %v660
    %v663 = vmul.bf16 1065369472, %v662
    %v664 = vrcp.bf16.pop %v661
    %v665 = vmul.bf16 1065369472, %v664
    %v666 = vmul.bf16 %v663, 1062027085
    %v667 = vmul.bf16 %v665, 1053638349
    %v668 = vmul.bf16 %v666, %v108
    %v669 = vld [vmem:[#allocation8] sm:$0xf]
    %v670 = vld [vmem:[#allocation8 + $0x4] sm:$0xf]
    %v671 = vld [vmem:[#allocation8 + $0x8] sm:$0xf]
    %v672 = vld [vmem:[#allocation8 + $0xc] sm:$0xf]
    %v673 = vld [vmem:[#allocation8 + $0x10] sm:$0xf]
    %v674 = vld [vmem:[#allocation8 + $0x14] sm:$0xf]
    %v675 = vld [vmem:[#allocation8 + $0x18] sm:$0xf]
    %v676 = vld [vmem:[#allocation8 + $0x1c] sm:$0xf]
    %v677 = vld [vmem:[#allocation8 + $0x20] sm:$0xf]
    %v678 = vld [vmem:[#allocation8 + $0x24] sm:$0xf]
    %v679 = vld [vmem:[#allocation8 + $0x28] sm:$0xf]
    %v680 = vld [vmem:[#allocation8 + $0x2c] sm:$0xf]
    %v681 = vld [vmem:[#allocation8 + $0x30] sm:$0xf]
    %v682 = vld [vmem:[#allocation8 + $0x34] sm:$0xf]
    %v683 = vld [vmem:[#allocation8 + $0x38] sm:$0xf]
    %v684 = vld [vmem:[#allocation8 + $0x3c] sm:$0xf]
    %v701 = vunpack.c.l.b16 %v669
    %v702 = vunpack.c.l.b16 %v670
    %v703 = vunpack.c.l.b16 %v671
    %v704 = vunpack.c.l.b16 %v672
    %v705 = vunpack.c.l.b16 %v673
    %v706 = vunpack.c.l.b16 %v674
    %v707 = vunpack.c.l.b16 %v675
    %v708 = vunpack.c.l.b16 %v676
    %v709 = vunpack.c.l.b16 %v677
    %v710 = vunpack.c.l.b16 %v678
    %v711 = vunpack.c.l.b16 %v679
    %v712 = vunpack.c.l.b16 %v680
    %v713 = vunpack.c.l.b16 %v681
    %v714 = vunpack.c.l.b16 %v682
    %v715 = vunpack.c.l.b16 %v683
    %v716 = vunpack.c.l.b16 %v684
    %v717 = vpack.c.b16 %v702, %v701
    %v718 = vpack.c.b16 %v704, %v703
    %v719 = vpack.c.b16 %v706, %v705
    %v720 = vpack.c.b16 %v708, %v707
    %v721 = vpack.c.b16 %v710, %v709
    %v722 = vpack.c.b16 %v712, %v711
    %v723 = vpack.c.b16 %v714, %v713
    %v724 = vpack.c.b16 %v716, %v715
    %733 = vmatprep.subr.bf16.mxu0 0
    %734 = vmatpush1.bf16.msra.mxu0 %v717
    %735 = vmatprep.subr.bf16.mxu0 0
    %736 = vmatpush1.bf16.msra.mxu0 %v718
    %737 = vmatprep.subr.bf16.mxu0 0
    %738 = vmatpush1.bf16.msra.mxu0 %v719
    %739 = vmatprep.subr.bf16.mxu0 0
    %740 = vmatpush1.bf16.msra.mxu0 %v720
    %741 = vmatprep.subr.bf16.mxu0 0
    %742 = vmatpush1.bf16.msra.mxu0 %v721
    %743 = vmatprep.subr.bf16.mxu0 0
    %744 = vmatpush1.bf16.msra.mxu0 %v722
    %745 = vmatprep.subr.bf16.mxu0 0
    %746 = vmatpush1.bf16.msra.mxu0 %v723
    %747 = vmatprep.subr.bf16.mxu0 0
    %748 = vmatpush1.bf16.msra.mxu0 %v724
    %749 = vmatprep.subr.bf16.mxu0 0
    %750 = vmatpush1.bf16.msra.mxu0 0
    %751 = vmatprep.subr.bf16.mxu0 0
    %752 = vmatpush1.bf16.msra.mxu0 0
    %753 = vmatprep.subr.bf16.mxu0 0
    %754 = vmatpush1.bf16.msra.mxu0 0
    %755 = vmatprep.subr.bf16.mxu0 0
    %756 = vmatpush1.bf16.msra.mxu0 0
    %757 = vmatprep.subr.bf16.mxu0 0
    %758 = vmatpush1.bf16.msra.mxu0 0
    %759 = vmatprep.subr.bf16.mxu0 0
    %760 = vmatpush1.bf16.msra.mxu0 0
    %761 = vmatprep.subr.bf16.mxu0 0
    %762 = vmatpush1.bf16.msra.mxu0 0
    %763 = vmatprep.subr.bf16.mxu0 0
    %764 = vmatpush1.bf16.msra.mxu0 0
    %765 = vmatprep.mubr.bf16.mxu0 0
    %766 = vmatmul.mubr.bf16.gmra.mrb[0].mxu0 %v668
    %v767 = vpop.f32.mrb[0].mxu0
    %v768 = vadd.f32 %v320, %v767
    %v769 = vpop.f32.mrb[0].mxu0
    %v770 = vpop.f32.mrb[0].mxu0
    %v771 = vpop.f32.mrb[0].mxu0
    %772 = vdwg.mxu0
    %773 = vmatprep.subr.mxu0 0.0
    %774 = vmatpush1.msra.mxu0 %v109
    %775 = vmatprep.subr.mxu0 0.0
    %776 = vmatpush1.msra.mxu0 %v111
    %777 = vmatprep.subr.mxu0 0.0
    %778 = vmatpush1.msra.mxu0 %v113
    %779 = vmatprep.subr.mxu0 0.0
    %780 = vmatpush1.msra.mxu0 %v115
    %781 = vmatprep.subr.mxu0 0.0
    %782 = vmatpush1.msra.mxu0 %v117
    %783 = vmatprep.subr.mxu0 0.0
    %784 = vmatpush1.msra.mxu0 %v119
    %785 = vmatprep.subr.mxu0 0.0
    %786 = vmatpush1.msra.mxu0 %v121
    %787 = vmatprep.subr.mxu0 0.0
    %788 = vmatpush1.msra.mxu0 %v123
    %789 = vmatprep.subr.mxu0 0.0
    %790 = vmatpush1.msra.mxu0 %v125
    %791 = vmatprep.subr.mxu0 0.0
    %792 = vmatpush1.msra.mxu0 %v127
    %793 = vmatprep.subr.mxu0 0.0
    %794 = vmatpush1.msra.mxu0 %v129
    %795 = vmatprep.subr.mxu0 0.0
    %796 = vmatpush1.msra.mxu0 %v131
    %797 = vmatprep.subr.mxu0 0.0
    %798 = vmatpush1.msra.mxu0 %v133
    %799 = vmatprep.subr.mxu0 0.0
    %800 = vmatpush1.msra.mxu0 %v135
    %801 = vmatprep.subr.mxu0 0.0
    %802 = vmatpush1.msra.mxu0 %v137
    %803 = vmatprep.subr.mxu0 0.0
    %804 = vmatpush1.msra.mxu0 %v139
    %805 = vmatprep.subr.mxu0 0.0
    %806 = vmatpush1.msra.mxu0 0.0
    %807 = vmatprep.subr.mxu0 0.0
    %808 = vmatpush1.msra.mxu0 0.0
    %809 = vmatprep.subr.mxu0 0.0
    %810 = vmatpush1.msra.mxu0 0.0
    %811 = vmatprep.subr.mxu0 0.0
    %812 = vmatpush1.msra.mxu0 0.0
    %813 = vmatprep.subr.mxu0 0.0
    %814 = vmatpush1.msra.mxu0 0.0
    %815 = vmatprep.subr.mxu0 0.0
    %816 = vmatpush1.msra.mxu0 0.0
    %817 = vmatprep.subr.mxu0 0.0
    %818 = vmatpush1.msra.mxu0 0.0
    %819 = vmatprep.subr.mxu0 0.0
    %820 = vmatpush1.msra.mxu0 0.0
    %821 = vmatprep.subr.mxu0 0.0
    %822 = vmatpush1.msra.mxu0 0.0
    %823 = vmatprep.subr.mxu0 0.0
    %824 = vmatpush1.msra.mxu0 0.0
    %825 = vmatprep.subr.mxu0 0.0
    %826 = vmatpush1.msra.mxu0 0.0
    %827 = vmatprep.subr.mxu0 0.0
    %828 = vmatpush1.msra.mxu0 0.0
    %829 = vmatprep.subr.mxu0 0.0
    %830 = vmatpush1.msra.mxu0 0.0
    %831 = vmatprep.subr.mxu0 0.0
    %832 = vmatpush1.msra.mxu0 0.0
    %833 = vmatprep.subr.mxu0 0.0
    %834 = vmatpush1.msra.mxu0 0.0
    %835 = vmatprep.subr.mxu0 0.0
    %836 = vmatpush1.msra.mxu0 0.0
    %837 = vmatprep.mubr.f32.mxu0 0.0
    %838 = vmatmul.mubr.f32.gmra.mrb[0].mxu0 %v768
    %v839 = vpop.f32.mrb[0].mxu0
    %v840 = vadd.f32 0.0, %v839
    %v841 = vpop.f32.mrb[0].mxu0
    %842 = vdwg.mxu0
    %v843 = vmul.f32 %v768, %v768
    %844 = vmatprep.subr.mxu0 0.0
    %845 = vmatpush1.msra.mxu0 %v109
    %846 = vmatprep.subr.mxu0 0.0
    %847 = vmatpush1.msra.mxu0 %v111
    %848 = vmatprep.subr.mxu0 0.0
    %849 = vmatpush1.msra.mxu0 %v113
    %850 = vmatprep.subr.mxu0 0.0
    %851 = vmatpush1.msra.mxu0 %v115
    %852 = vmatprep.subr.mxu0 0.0
    %853 = vmatpush1.msra.mxu0 %v117
    %854 = vmatprep.subr.mxu0 0.0
    %855 = vmatpush1.msra.mxu0 %v119
    %856 = vmatprep.subr.mxu0 0.0
    %857 = vmatpush1.msra.mxu0 %v121
    %858 = vmatprep.subr.mxu0 0.0
    %859 = vmatpush1.msra.mxu0 %v123
    %860 = vmatprep.subr.mxu0 0.0
    %861 = vmatpush1.msra.mxu0 %v125
    %862 = vmatprep.subr.mxu0 0.0
    %863 = vmatpush1.msra.mxu0 %v127
    %864 = vmatprep.subr.mxu0 0.0
    %865 = vmatpush1.msra.mxu0 %v129
    %866 = vmatprep.subr.mxu0 0.0
    %867 = vmatpush1.msra.mxu0 %v131
    %868 = vmatprep.subr.mxu0 0.0
    %869 = vmatpush1.msra.mxu0 %v133
    %870 = vmatprep.subr.mxu0 0.0
    %871 = vmatpush1.msra.mxu0 %v135
    %872 = vmatprep.subr.mxu0 0.0
    %873 = vmatpush1.msra.mxu0 %v137
    %874 = vmatprep.subr.mxu0 0.0
    %875 = vmatpush1.msra.mxu0 %v139
    %876 = vmatprep.subr.mxu0 0.0
    %877 = vmatpush1.msra.mxu0 0.0
    %878 = vmatprep.subr.mxu0 0.0
    %879 = vmatpush1.msra.mxu0 0.0
    %880 = vmatprep.subr.mxu0 0.0
    %881 = vmatpush1.msra.mxu0 0.0
    %882 = vmatprep.subr.mxu0 0.0
    %883 = vmatpush1.msra.mxu0 0.0
    %884 = vmatprep.subr.mxu0 0.0
    %885 = vmatpush1.msra.mxu0 0.0
    %886 = vmatprep.subr.mxu0 0.0
    %887 = vmatpush1.msra.mxu0 0.0
    %888 = vmatprep.subr.mxu0 0.0
    %889 = vmatpush1.msra.mxu0 0.0
    %890 = vmatprep.subr.mxu0 0.0
    %891 = vmatpush1.msra.mxu0 0.0
    %892 = vmatprep.subr.mxu0 0.0
    %893 = vmatpush1.msra.mxu0 0.0
    %894 = vmatprep.subr.mxu0 0.0
    %895 = vmatpush1.msra.mxu0 0.0
    %896 = vmatprep.subr.mxu0 0.0
    %897 = vmatpush1.msra.mxu0 0.0
    %898 = vmatprep.subr.mxu0 0.0
    %899 = vmatpush1.msra.mxu0 0.0
    %900 = vmatprep.subr.mxu0 0.0
    %901 = vmatpush1.msra.mxu0 0.0
    %902 = vmatprep.subr.mxu0 0.0
    %903 = vmatpush1.msra.mxu0 0.0
    %904 = vmatprep.subr.mxu0 0.0
    %905 = vmatpush1.msra.mxu0 0.0
    %906 = vmatprep.subr.mxu0 0.0
    %907 = vmatpush1.msra.mxu0 0.0
    %908 = vmatprep.mubr.f32.mxu0 0.0
    %909 = vmatmul.mubr.f32.gmra.mrb[0].mxu0 %v843
    %v910 = vpop.f32.mrb[0].mxu0
    %v911 = vadd.f32 0.0, %v910
    %v912 = vpop.f32.mrb[0].mxu0
    %913 = vdwg.mxu0
    %v914 = vmul.f32 %v840, %v840
    %v915 = vsub.f32 %v911, %v914
    %v916 = vmax.f32 %v915, 0.0
    %v917 = vsub.f32 %v768, %v840
    %v918 = vadd.f32 %v916, 1e-05
    %v919 = vrsqrt.pop %v918
    %v920 = vmul.f32 %v917, %v919
    %v921 = vmul.f32 %v920, %v327
    %v922 = vadd.f32 %v921, %v328
    %v923 = vpack.c.bf16 %v922, %v922
    %v924 = vtanh.bf16.pop %v923
    %v925 = vpack.c.bf16 %v322, %v322
    %v926 = vtanh.bf16.pop %v925
    %v927 = vsub.bf16 %v924, %v108
    %v928 = vmul.bf16 %v667, %v927
    %v929 = vmul.bf16 %v926, %v928
    %v930 = vunpack.c.l.bf16 %v929
    %v931 = vadd.f32 %v107, %v930
    %932 = vst [vmem:[#allocation13] sm:$0xff] %v931
    // Predicated region
    $region54: #{tpu_custom_call.1} parent=1 // pred_check
      _
    $region55: #{tpu_custom_call.1} parent=1 // pred_check_branch
      %934 = sbr.rel (0) target = $region57
    $region56: #{tpu_custom_call.1} parent=1 // pred_region
      %s936 = ssub.s32 128, 128
      %937 = vsyncadd [#allocation4], %s936
      %s939 = sshll.u32 [#allocation13], 4
      %s940 = int_to_ptr.vmem [resolvable:$true] %s939
      %942 = dma.vmem_to_hbm [thread:$0]  %s940, 128, %s7, [#allocation4]
    $region57: #{tpu_custom_call.1} parent=1 // pred_fallthru
      _
    // Predicated region
    $region58: #{tpu_custom_call.1} parent=1 // pred_check
      _
    $region59: #{tpu_custom_call.1} parent=1 // pred_check_branch
      %944 = sbr.rel (0) target = $region61
    $region60: #{tpu_custom_call.1} parent=1 // pred_region
      %945 = dma.done [#allocation4], 128
    $region61: #{tpu_custom_call.1} parent=1 // pred_fallthru
      _
    %946 = vsyncpa [#allocation3], 1
    %947 = vsyncpa [#allocation6], 1
    %948 = vsyncpa [#allocation9], 1
    %949 = vsyncpa [#allocation12], 1
    %950 = vsyncpa [#allocation4], 1

</llo_original>
